<compile_context>
chip_gen: v6e
topology: v6e:2x2x1
jax: 0.10.0
libtpu: 0.0.40
codegen_flags: <defaults>
</compile_context>

<pallas_src>
import jax
import jax.numpy as jnp
from jax.experimental import pallas as pl
from jax.experimental.pallas import tpu as pltpu

OBS_DIM = 1          # EncoderNetwork(observation_dim=1, ...)
ENC_HIDDEN = 100
ENC_OUT = 7          # encoder.output_dim
EM_IN = ENC_OUT + 1  # 8 = encoder.output_dim + 1
EM_HIDDEN = 100
PAD = 128            # lane-dense padded hidden width


def entnet_kernel(x_ref,
                  ew1, eb1, ew2, eb2,
                  wf, bf, mw2, mb2, mw3, mb3,
                  o_ref):
    """Whole EntNetwork forward for one dataset X[0] in a single invocation."""
    x = x_ref[...]                                                     # (N, 1) f32

    # ---- Encoder layer 1: K=1 "matmul" done as a VPU broadcast outer product ----
    h = jnp.maximum(x * ew1[...] + eb1[...], 0.0)                      # (N, 128)

    # ---- Encoder layer 2 (lane-dense 128x128 MXU matmul) ----
    h = jnp.maximum(
        jnp.dot(h, ew2[...], preferred_element_type=jnp.float32) + eb2[...], 0.0)

    # ---- Pool: sum over rows (count feature + encoder layer 3 are folded into
    # the emitter's first layer in the wrapper) ----
    h_sum = jnp.sum(h, axis=0, keepdims=True)                          # (1, 128)

    # ---- Emitter (first layer uses folded ew3@mw1[1:] weight and N-baked bias) ----
    g = jnp.maximum(
        jnp.dot(h_sum, wf[...], preferred_element_type=jnp.float32) + bf[...], 0.0)
    g = jnp.maximum(
        jnp.dot(g, mw2[...], preferred_element_type=jnp.float32) + mb2[...], 0.0)
    # Lane-dense (1,128) output slab; the real scalar lives in lane 0.
    o_ref[...] = jnp.dot(g, mw3[...], preferred_element_type=jnp.float32) + mb3[...]


def _pad_to(a, shape):
    return jnp.pad(a, [(0, t - s) for s, t in zip(a.shape, shape)])


def ent_network_forward(X, params):
    x0 = X[0].astype(jnp.float32)                     # (N, obs_dim); only X[0] is used
    n_rows = x0.shape[0]                              # static per trace
    count = jnp.float32(n_rows)

    # ---- Zero-pad hidden dims 100 -> 128 (padded lanes stay 0 through ReLU) ----
    ew1 = _pad_to(params["enc_w1"], (OBS_DIM, PAD))   # (1, 128)
    eb1 = _pad_to(params["enc_b1"], (1, PAD))
    ew2 = _pad_to(params["enc_w2"], (PAD, PAD))       # (128, 128)
    eb2 = _pad_to(params["enc_b2"], (1, PAD))

    # ---- Fold encoder layer 3 + count feature into emitter layer 1 ----
    mw1 = params["em_w1"]                             # (8, 100)
    mw1_cnt = mw1[0:1, :]                             # multiplies the count feature
    mw1_enc = mw1[1:, :]                              # multiplies summed encodings
    w_fold = _pad_to(params["enc_w3"] @ mw1_enc, (PAD, PAD))            # (128, 128)
    b_fold = _pad_to(count * (params["enc_b3"] @ mw1_enc)
                     + count * mw1_cnt
                     + params["em_b1"], (1, PAD))                        # (1, 128)

    mw2 = _pad_to(params["em_w2"], (PAD, PAD))
    mb2 = _pad_to(params["em_b2"], (1, PAD))
    mw3 = _pad_to(params["em_w3"], (PAD, PAD))        # (100,1) -> (128,128), lane 0 live
    mb3 = _pad_to(params["em_b3"], (1, PAD))

    args = (x0, ew1, eb1, ew2, eb2, w_fold, b_fold, mw2, mb2, mw3, mb3)

    flops = 2 * (n_rows * PAD + n_rows * PAD * PAD + 3 * PAD * PAD)
    bytes_accessed = 4 * (sum(int(a.size) for a in args) + PAD)

    vm = pl.BlockSpec(memory_space=pltpu.MemorySpace.VMEM)
    out = pl.pallas_call(
        entnet_kernel,
        out_shape=jax.ShapeDtypeStruct((1, PAD), jnp.float32),
        in_specs=[vm] * len(args),
        out_specs=vm,
        cost_estimate=pl.CostEstimate(flops=flops, transcendentals=0,
                                      bytes_accessed=bytes_accessed),
    )(*args)
    # TODO(synk): for large N, tile rows with a grid + VMEM h_sum accumulator
    # (needed before N grows past the scoped-VMEM limit, esp. on v7x's 64 MiB).
    return out[0:1, 0]   # PyTorch emitter output on an (8,) vector has shape (1,)


def init_params(key):
    """Deterministic PyTorch-style Linear init (uniform +/- 1/sqrt(fan_in))."""
    def linear(k, fan_in, fan_out):
        kw, kb = jax.random.split(k)
        bound = 1.0 / jnp.sqrt(jnp.float32(fan_in))
        w = jax.random.uniform(kw, (fan_in, fan_out), jnp.float32, -bound, bound)
        b = jax.random.uniform(kb, (1, fan_out), jnp.float32, -bound, bound)
        return w, b

    keys = jax.random.split(key, 6)
    p = {}
    p["enc_w1"], p["enc_b1"] = linear(keys[0], OBS_DIM, ENC_HIDDEN)
    p["enc_w2"], p["enc_b2"] = linear(keys[1], ENC_HIDDEN, ENC_HIDDEN)
    p["enc_w3"], p["enc_b3"] = linear(keys[2], ENC_HIDDEN, ENC_OUT)
    p["em_w1"],  p["em_b1"]  = linear(keys[3], EM_IN, EM_HIDDEN)
    p["em_w2"],  p["em_b2"]  = linear(keys[4], EM_HIDDEN, EM_HIDDEN)
    p["em_w3"],  p["em_b3"]  = linear(keys[5], EM_HIDDEN, 1)
    return p


def reference_forward(X, p):
    """Pure-JAX reference mirroring the PyTorch loop semantics (unpadded, unfolded)."""
    x0 = X[0]
    h = jnp.maximum(x0 @ p["enc_w1"] + p["enc_b1"], 0.0)
    h = jnp.maximum(h @ p["enc_w2"] + p["enc_b2"], 0.0)
    enc = h @ p["enc_w3"] + p["enc_b3"]                                  # (N, 7)
    encoded = jnp.concatenate(
        [jnp.full((1, 1), x0.shape[0], jnp.float32),
         jnp.sum(enc, axis=0, keepdims=True)], axis=1)                   # (1, 8)
    g = jnp.maximum(encoded @ p["em_w1"] + p["em_b1"], 0.0)
    g = jnp.maximum(g @ p["em_w2"] + p["em_b2"], 0.0)
    return (g @ p["em_w3"] + p["em_b3"]).reshape((1,))


if __name__ == "__main__":
    key = jax.random.PRNGKey(0)
    kx, kp = jax.random.split(key)

    # X[0] is iterated row-by-row and each row feeds Linear(1, 100), so the trailing
    # dim is obs_dim=1.  Small shapes: batch=2 datasets, N=8 rows each.
    X = jax.random.normal(kx, (2, 8, OBS_DIM), dtype=jnp.float32)
    params = init_params(kp)

    out = ent_network_forward(X, params)
    out = jax.block_until_ready(out)

    ref = reference_forward(X, params)
    assert out.shape == (1,)
    assert jnp.allclose(out, ref, atol=1e-4, rtol=1e-4), (out, ref)

    print("KERNEL_OK")
</pallas_src>

<mosaic_0001>
module attributes {stable_mosaic.version = 11 : i64} {
  func.func @entnet_kernel(%arg0: memref<8x1xf32, #tpu.memory_space<vmem>>, %arg1: memref<1x128xf32, #tpu.memory_space<vmem>>, %arg2: memref<1x128xf32, #tpu.memory_space<vmem>>, %arg3: memref<128x128xf32, #tpu.memory_space<vmem>>, %arg4: memref<1x128xf32, #tpu.memory_space<vmem>>, %arg5: memref<128x128xf32, #tpu.memory_space<vmem>>, %arg6: memref<1x128xf32, #tpu.memory_space<vmem>>, %arg7: memref<128x128xf32, #tpu.memory_space<vmem>>, %arg8: memref<1x128xf32, #tpu.memory_space<vmem>>, %arg9: memref<128x128xf32, #tpu.memory_space<vmem>>, %arg10: memref<1x128xf32, #tpu.memory_space<vmem>>, %arg11: memref<1x128xf32, #tpu.memory_space<vmem>>) attributes {dimension_semantics = [], scalar_prefetch = 0 : i64, scratch_operands = 0 : i64, tpu.core_type = #tpu.core_type<tc>} {
    %c0 = arith.constant 0 : index
    %c0_0 = arith.constant 0 : index
    %0 = vector.load %arg0[%c0, %c0_0] : memref<8x1xf32, #tpu.memory_space<vmem>>, vector<8x1xf32>
    %c0_1 = arith.constant 0 : index
    %c0_2 = arith.constant 0 : index
    %1 = vector.load %arg1[%c0_1, %c0_2] : memref<1x128xf32, #tpu.memory_space<vmem>>, vector<1x128xf32>
    %2 = vector.broadcast %0 : vector<8x1xf32> to vector<8x128xf32>
    %3 = vector.broadcast %1 : vector<1x128xf32> to vector<8x128xf32>
    %4 = arith.mulf %2, %3 : vector<8x128xf32>
    %c0_3 = arith.constant 0 : index
    %c0_4 = arith.constant 0 : index
    %5 = vector.load %arg2[%c0_3, %c0_4] : memref<1x128xf32, #tpu.memory_space<vmem>>, vector<1x128xf32>
    %6 = vector.broadcast %5 : vector<1x128xf32> to vector<8x128xf32>
    %7 = arith.addf %4, %6 : vector<8x128xf32>
    %cst = arith.constant 0.000000e+00 : f32
    %8 = vector.broadcast %cst : f32 to vector<8x128xf32>
    %9 = arith.maximumf %7, %8 : vector<8x128xf32>
    %c0_5 = arith.constant 0 : index
    %c0_6 = arith.constant 0 : index
    %10 = vector.load %arg3[%c0_5, %c0_6] : memref<128x128xf32, #tpu.memory_space<vmem>>, vector<128x128xf32>
    %cst_7 = arith.constant dense<0.000000e+00> : vector<8x128xf32>
    %11 = tpu.matmul %9, %10, %cst_7 {dimension_numbers = #tpu.dot_dimension_numbers<[1], [0], [0], [1], [0, 0, 1, 1], [], []>} : vector<8x128xf32>, vector<128x128xf32>, vector<8x128xf32> -> vector<8x128xf32>
    %c0_8 = arith.constant 0 : index
    %c0_9 = arith.constant 0 : index
    %12 = vector.load %arg4[%c0_8, %c0_9] : memref<1x128xf32, #tpu.memory_space<vmem>>, vector<1x128xf32>
    %13 = vector.broadcast %12 : vector<1x128xf32> to vector<8x128xf32>
    %14 = arith.addf %11, %13 : vector<8x128xf32>
    %cst_10 = arith.constant 0.000000e+00 : f32
    %15 = vector.broadcast %cst_10 : f32 to vector<8x128xf32>
    %16 = arith.maximumf %14, %15 : vector<8x128xf32>
    %cst_11 = arith.constant dense<0.000000e+00> : vector<128xf32>
    %17 = vector.multi_reduction <add>, %16, %cst_11 [0] : vector<8x128xf32> to vector<128xf32>
    %18 = vector.shape_cast %17 : vector<128xf32> to vector<1x128xf32>
    %c0_12 = arith.constant 0 : index
    %c0_13 = arith.constant 0 : index
    %19 = vector.load %arg5[%c0_12, %c0_13] : memref<128x128xf32, #tpu.memory_space<vmem>>, vector<128x128xf32>
    %cst_14 = arith.constant dense<0.000000e+00> : vector<1x128xf32>
    %20 = tpu.matmul %18, %19, %cst_14 {dimension_numbers = #tpu.dot_dimension_numbers<[1], [0], [0], [1], [0, 0, 1, 1], [], []>} : vector<1x128xf32>, vector<128x128xf32>, vector<1x128xf32> -> vector<1x128xf32>
    %c0_15 = arith.constant 0 : index
    %c0_16 = arith.constant 0 : index
    %21 = vector.load %arg6[%c0_15, %c0_16] : memref<1x128xf32, #tpu.memory_space<vmem>>, vector<1x128xf32>
    %22 = arith.addf %20, %21 : vector<1x128xf32>
    %cst_17 = arith.constant 0.000000e+00 : f32
    %23 = vector.broadcast %cst_17 : f32 to vector<1x128xf32>
    %24 = arith.maximumf %22, %23 : vector<1x128xf32>
    %c0_18 = arith.constant 0 : index
    %c0_19 = arith.constant 0 : index
    %25 = vector.load %arg7[%c0_18, %c0_19] : memref<128x128xf32, #tpu.memory_space<vmem>>, vector<128x128xf32>
    %cst_20 = arith.constant dense<0.000000e+00> : vector<1x128xf32>
    %26 = tpu.matmul %24, %25, %cst_20 {dimension_numbers = #tpu.dot_dimension_numbers<[1], [0], [0], [1], [0, 0, 1, 1], [], []>} : vector<1x128xf32>, vector<128x128xf32>, vector<1x128xf32> -> vector<1x128xf32>
    %c0_21 = arith.constant 0 : index
    %c0_22 = arith.constant 0 : index
    %27 = vector.load %arg8[%c0_21, %c0_22] : memref<1x128xf32, #tpu.memory_space<vmem>>, vector<1x128xf32>
    %28 = arith.addf %26, %27 : vector<1x128xf32>
    %cst_23 = arith.constant 0.000000e+00 : f32
    %29 = vector.broadcast %cst_23 : f32 to vector<1x128xf32>
    %30 = arith.maximumf %28, %29 : vector<1x128xf32>
    %c0_24 = arith.constant 0 : index
    %c0_25 = arith.constant 0 : index
    %31 = vector.load %arg9[%c0_24, %c0_25] : memref<128x128xf32, #tpu.memory_space<vmem>>, vector<128x128xf32>
    %cst_26 = arith.constant dense<0.000000e+00> : vector<1x128xf32>
    %32 = tpu.matmul %30, %31, %cst_26 {dimension_numbers = #tpu.dot_dimension_numbers<[1], [0], [0], [1], [0, 0, 1, 1], [], []>} : vector<1x128xf32>, vector<128x128xf32>, vector<1x128xf32> -> vector<1x128xf32>
    %c0_27 = arith.constant 0 : index
    %c0_28 = arith.constant 0 : index
    %33 = vector.load %arg10[%c0_27, %c0_28] : memref<1x128xf32, #tpu.memory_space<vmem>>, vector<1x128xf32>
    %34 = arith.addf %32, %33 : vector<1x128xf32>
    %c0_29 = arith.constant 0 : index
    %c0_30 = arith.constant 0 : index
    %35 = vector.load %arg11[%c0_29, %c0_30] : memref<1x128xf32, #tpu.memory_space<vmem>>, vector<1x128xf32>
    tpu.vector_store %arg11[%c0_29, %c0_30], %34 {strides = array<i32>} : memref<1x128xf32, #tpu.memory_space<vmem>>, vector<1x128xf32>,
    return
  }
}

</mosaic_0001>

<llo_original>
// kernel: tpu_custom_call.1
$region0: #{tpu_custom_call.1}
  #allocation0 [shape = 'u32[]', space=smem, size = 0x4, offset = 0x4, fixed_abs, tag = 'smem constant byte address 0x4 - core index']
  #allocation1 [shape = 'u32[144,128]{1,0:T(1,128)}', space=vmem, size = 0x12000, scoped, tag = 'internal scratch']
  %s0 = inlined_call_operand.vmem [shape: f32[8,1], index: 0, kind: input, shape index: {}]
  %s1 = inlined_call_operand.vmem [shape: f32[1,128], index: 1, kind: input, shape index: {}]
  %s2 = inlined_call_operand.vmem [shape: f32[1,128], index: 2, kind: input, shape index: {}]
  %s3 = inlined_call_operand.hbm [shape: f32[128,128], index: 3, kind: input, shape index: {}]
  %s4 = inlined_call_operand.vmem [shape: f32[1,128], index: 4, kind: input, shape index: {}]
  %s5 = inlined_call_operand.hbm [shape: f32[128,128], index: 5, kind: input, shape index: {}]
  %s6 = inlined_call_operand.vmem [shape: f32[1,128], index: 6, kind: input, shape index: {}]
  %s7 = inlined_call_operand.hbm [shape: f32[128,128], index: 7, kind: input, shape index: {}]
  %s8 = inlined_call_operand.vmem [shape: f32[1,128], index: 8, kind: input, shape index: {}]
  %s9 = inlined_call_operand.hbm [shape: f32[128,128], index: 9, kind: input, shape index: {}]
  %s10 = inlined_call_operand.vmem [shape: f32[1,128], index: 10, kind: input, shape index: {}]
  %s11 = inlined_call_operand.hbm [shape: f32[1,128], index: 11, kind: output, shape index: {}]
  %s12 = sld [smem:[#allocation0]]
  $region70: #{tpu_custom_call.1} parent=0
    _
  %s14 = ssub.s32 1, %s12
  %s15 = scalar_select 0, %s14, %s12
  $region1: #{tpu_custom_call.1} parent=0
    #allocation2 [shape = 'u8[65536]{0}', space=vmem, size = 0x10000, scoped, tag = 'input window, operand 3, single buffered']
    #allocation3 [shape = 's32[1]{0}', space=sflag, size = 0x4, scoped, tag = 'scoped memory for tpu_custom_call.1']
    #allocation4 [shape = 's32[1]{0}', space=sflag, size = 0x4, scoped, tag = 'scoped memory for tpu_custom_call.1']
    #allocation5 [shape = 'u8[65536]{0}', space=vmem, size = 0x10000, scoped, tag = 'input window, operand 5, single buffered']
    #allocation6 [shape = 's32[1]{0}', space=sflag, size = 0x4, scoped, tag = 'scoped memory for tpu_custom_call.1']
    #allocation7 [shape = 'u8[65536]{0}', space=vmem, size = 0x10000, scoped, tag = 'input window, operand 7, single buffered']
    #allocation8 [shape = 'u8[65536]{0}', space=vmem, size = 0x10000, scoped, tag = 'input window, operand 9, single buffered']
    #allocation9 [shape = 's32[1]{0}', space=sflag, size = 0x4, scoped, tag = 'scoped memory for tpu_custom_call.1']
    #allocation10 [shape = 'u8[512]{0}', space=vmem, size = 0x400, scoped, tag = 'output window, operand 0, single buffered']
    %16 = vsyncpa [#allocation3], 0
    %17 = vsyncpa [#allocation6], 0
    %18 = vsyncpa [#allocation9], 0
    %19 = vsyncpa [#allocation4], 0
    // Predicated region
    $region2: #{tpu_custom_call.1} parent=1 // pred_check
      _
    $region3: #{tpu_custom_call.1} parent=1 // pred_check_branch
      %21 = sbr.rel (0) target = $region5
    $region4: #{tpu_custom_call.1} parent=1 // pred_region
      _
    $region5: #{tpu_custom_call.1} parent=1 // pred_fallthru
      _
    // Predicated region
    $region6: #{tpu_custom_call.1} parent=1 // pred_check
      _
    $region7: #{tpu_custom_call.1} parent=1 // pred_check_branch
      %23 = sbr.rel (0) target = $region9
    $region8: #{tpu_custom_call.1} parent=1 // pred_region
      _
    $region9: #{tpu_custom_call.1} parent=1 // pred_fallthru
      _
    // Predicated region
    $region10: #{tpu_custom_call.1} parent=1 // pred_check
      _
    $region11: #{tpu_custom_call.1} parent=1 // pred_check_branch
      %25 = sbr.rel (0) target = $region13
    $region12: #{tpu_custom_call.1} parent=1 // pred_region
      _
    $region13: #{tpu_custom_call.1} parent=1 // pred_fallthru
      _
    // Predicated region
    $region14: #{tpu_custom_call.1} parent=1 // pred_check
      _
    $region15: #{tpu_custom_call.1} parent=1 // pred_check_branch
      %27 = sbr.rel (0) target = $region17
    $region16: #{tpu_custom_call.1} parent=1 // pred_region
      %s29 = ssub.s32 2048, 2048
      %30 = vsyncadd [#allocation3], %s29
      %s31 = sshll.u32 [#allocation2], 4
      %s32 = int_to_ptr.vmem [resolvable:$true] %s31
      %37 = dma.hbm_to_vmem [thread:$0]  %s3, 2048, %s32, [#allocation3], 128, 128, 8
    $region17: #{tpu_custom_call.1} parent=1 // pred_fallthru
      _
    // Predicated region
    $region18: #{tpu_custom_call.1} parent=1 // pred_check
      _
    $region19: #{tpu_custom_call.1} parent=1 // pred_check_branch
      %39 = sbr.rel (0) target = $region21
    $region20: #{tpu_custom_call.1} parent=1 // pred_region
      _
    $region21: #{tpu_custom_call.1} parent=1 // pred_fallthru
      _
    // Predicated region
    $region22: #{tpu_custom_call.1} parent=1 // pred_check
      _
    $region23: #{tpu_custom_call.1} parent=1 // pred_check_branch
      %41 = sbr.rel (0) target = $region25
    $region24: #{tpu_custom_call.1} parent=1 // pred_region
      %s43 = ssub.s32 2048, 2048
      %44 = vsyncadd [#allocation6], %s43
      %s45 = sshll.u32 [#allocation5], 4
      %s46 = int_to_ptr.vmem [resolvable:$true] %s45
      %51 = dma.hbm_to_vmem [thread:$0]  %s5, 2048, %s46, [#allocation6], 128, 128, 8
    $region25: #{tpu_custom_call.1} parent=1 // pred_fallthru
      _
    // Predicated region
    $region26: #{tpu_custom_call.1} parent=1 // pred_check
      _
    $region27: #{tpu_custom_call.1} parent=1 // pred_check_branch
      %53 = sbr.rel (0) target = $region29
    $region28: #{tpu_custom_call.1} parent=1 // pred_region
      _
    $region29: #{tpu_custom_call.1} parent=1 // pred_fallthru
      _
    // Predicated region
    $region30: #{tpu_custom_call.1} parent=1 // pred_check
      _
    $region31: #{tpu_custom_call.1} parent=1 // pred_check_branch
      %55 = sbr.rel (0) target = $region33
    $region32: #{tpu_custom_call.1} parent=1 // pred_region
      %s57 = ssub.s32 2048, 2048
      %58 = vsyncadd [#allocation6], %s57
      %s59 = sshll.u32 [#allocation7], 4
      %s60 = int_to_ptr.vmem [resolvable:$true] %s59
      %65 = dma.hbm_to_vmem [thread:$0]  %s7, 2048, %s60, [#allocation6], 128, 128, 8
    $region33: #{tpu_custom_call.1} parent=1 // pred_fallthru
      _
    // Predicated region
    $region34: #{tpu_custom_call.1} parent=1 // pred_check
      _
    $region35: #{tpu_custom_call.1} parent=1 // pred_check_branch
      %67 = sbr.rel (0) target = $region37
    $region36: #{tpu_custom_call.1} parent=1 // pred_region
      _
    $region37: #{tpu_custom_call.1} parent=1 // pred_fallthru
      _
    // Predicated region
    $region38: #{tpu_custom_call.1} parent=1 // pred_check
      _
    $region39: #{tpu_custom_call.1} parent=1 // pred_check_branch
      %69 = sbr.rel (0) target = $region41
    $region40: #{tpu_custom_call.1} parent=1 // pred_region
      %s71 = ssub.s32 2048, 2048
      %72 = vsyncadd [#allocation9], %s71
      %s73 = sshll.u32 [#allocation8], 4
      %s74 = int_to_ptr.vmem [resolvable:$true] %s73
      %79 = dma.hbm_to_vmem [thread:$0]  %s9, 2048, %s74, [#allocation9], 128, 128, 8
    $region41: #{tpu_custom_call.1} parent=1 // pred_fallthru
      _
    // Predicated region
    $region42: #{tpu_custom_call.1} parent=1 // pred_check
      _
    $region43: #{tpu_custom_call.1} parent=1 // pred_check_branch
      %81 = sbr.rel (0) target = $region45
    $region44: #{tpu_custom_call.1} parent=1 // pred_region
      _
    $region45: #{tpu_custom_call.1} parent=1 // pred_fallthru
      _
    // Predicated region
    $region46: #{tpu_custom_call.1} parent=1 // pred_check
      _
    $region47: #{tpu_custom_call.1} parent=1 // pred_check_branch
      %83 = sbr.rel (0) target = $region49
    $region48: #{tpu_custom_call.1} parent=1 // pred_region
      %84 = dma.done [#allocation3], 2048
    $region49: #{tpu_custom_call.1} parent=1 // pred_fallthru
      _
    // Predicated region
    $region50: #{tpu_custom_call.1} parent=1 // pred_check
      _
    $region51: #{tpu_custom_call.1} parent=1 // pred_check_branch
      %86 = sbr.rel (0) target = $region53
    $region52: #{tpu_custom_call.1} parent=1 // pred_region
      %87 = dma.done [#allocation6], 2048
    $region53: #{tpu_custom_call.1} parent=1 // pred_fallthru
      _
    // Predicated region
    $region54: #{tpu_custom_call.1} parent=1 // pred_check
      _
    $region55: #{tpu_custom_call.1} parent=1 // pred_check_branch
      %89 = sbr.rel (0) target = $region57
    $region56: #{tpu_custom_call.1} parent=1 // pred_region
      %90 = dma.done [#allocation6], 2048
    $region57: #{tpu_custom_call.1} parent=1 // pred_fallthru
      _
    // Predicated region
    $region58: #{tpu_custom_call.1} parent=1 // pred_check
      _
    $region59: #{tpu_custom_call.1} parent=1 // pred_check_branch
      %92 = sbr.rel (0) target = $region61
    $region60: #{tpu_custom_call.1} parent=1 // pred_region
      %93 = dma.done [#allocation9], 2048
    $region61: #{tpu_custom_call.1} parent=1 // pred_fallthru
      _
    %v94 = vld [vmem:[%s0] sm:$0xff]
    %v95 = vld [vmem:[%s1] sm:$0x1]
    %97 = vset.pattern.permute.xlu0 0
    %98 = vperm.xlu0 %97, %v94
    %v99 = vpop.permute.xlu0 %98
    %v102 = vlaneseq
    %v103 = vshrl.u32 %v102, 7
    %v104 = vsub.s32 0, %v103
    %v105 = vrot.slane %v95, %v104
    %v107 = vmul.f32 %v99, %v105
    %v108 = vld [vmem:[%s2] sm:$0x1]
    %v110 = vlaneseq
    %v111 = vshrl.u32 %v110, 7
    %v112 = vsub.s32 0, %v111
    %v113 = vrot.slane %v108, %v112
    %v115 = vadd.f32 %v107, %v113
    %v116 = vmax.f32 %v115, 0.0
    %v117 = vld [vmem:[#allocation2] sm:$0xff]
    %v118 = vld [vmem:[#allocation2 + $0x8] sm:$0xff]
    %v119 = vld [vmem:[#allocation2 + $0x10] sm:$0xff]
    %v120 = vld [vmem:[#allocation2 + $0x18] sm:$0xff]
    %v121 = vld [vmem:[#allocation2 + $0x20] sm:$0xff]
    %v122 = vld [vmem:[#allocation2 + $0x28] sm:$0xff]
    %v123 = vld [vmem:[#allocation2 + $0x30] sm:$0xff]
    %v124 = vld [vmem:[#allocation2 + $0x38] sm:$0xff]
    %v125 = vld [vmem:[#allocation2 + $0x40] sm:$0xff]
    %v126 = vld [vmem:[#allocation2 + $0x48] sm:$0xff]
    %v127 = vld [vmem:[#allocation2 + $0x50] sm:$0xff]
    %v128 = vld [vmem:[#allocation2 + $0x58] sm:$0xff]
    %v129 = vld [vmem:[#allocation2 + $0x60] sm:$0xff]
    %v130 = vld [vmem:[#allocation2 + $0x68] sm:$0xff]
    %v131 = vld [vmem:[#allocation2 + $0x70] sm:$0xff]
    %v132 = vld [vmem:[#allocation2 + $0x78] sm:$0xff]
    %v133 = vld [vmem:[%s4] sm:$0x1]
    %v135 = vlaneseq
    %v136 = vshrl.u32 %v135, 7
    %v137 = vsub.s32 0, %v136
    %v138 = vrot.slane %v133, %v137
    %140 = vmatprep.subr.mxu0 0.0
    %141 = vmatpush1.msra.mxu0 %v132
    %142 = vmatprep.subr.mxu0 0.0
    %143 = vmatpush1.msra.mxu0 %v131
    %144 = vmatprep.subr.mxu0 0.0
    %145 = vmatpush1.msra.mxu0 %v130
    %146 = vmatprep.subr.mxu0 0.0
    %147 = vmatpush1.msra.mxu0 %v129
    %148 = vmatprep.subr.mxu0 0.0
    %149 = vmatpush1.msra.mxu0 %v128
    %150 = vmatprep.subr.mxu0 0.0
    %151 = vmatpush1.msra.mxu0 %v127
    %152 = vmatprep.subr.mxu0 0.0
    %153 = vmatpush1.msra.mxu0 %v126
    %154 = vmatprep.subr.mxu0 0.0
    %155 = vmatpush1.msra.mxu0 %v125
    %156 = vmatprep.subr.mxu0 0.0
    %157 = vmatpush1.msra.mxu0 %v124
    %158 = vmatprep.subr.mxu0 0.0
    %159 = vmatpush1.msra.mxu0 %v123
    %160 = vmatprep.subr.mxu0 0.0
    %161 = vmatpush1.msra.mxu0 %v122
    %162 = vmatprep.subr.mxu0 0.0
    %163 = vmatpush1.msra.mxu0 %v121
    %164 = vmatprep.subr.mxu0 0.0
    %165 = vmatpush1.msra.mxu0 %v120
    %166 = vmatprep.subr.mxu0 0.0
    %167 = vmatpush1.msra.mxu0 %v119
    %168 = vmatprep.subr.mxu0 0.0
    %169 = vmatpush1.msra.mxu0 %v118
    %170 = vmatprep.subr.mxu0 0.0
    %171 = vmatpush1.msra.mxu0 %v117
    %172 = vmatprep.subr.mxu0 0.0
    %173 = vmatpush2.msra.mxu0 0.0
    %174 = vmatprep.subr.mxu0 0.0
    %175 = vmatpush2.msra.mxu0 0.0
    %176 = vmatprep.subr.mxu0 0.0
    %177 = vmatpush2.msra.mxu0 0.0
    %178 = vmatprep.subr.mxu0 0.0
    %179 = vmatpush2.msra.mxu0 0.0
    %180 = vmatprep.subr.mxu0 0.0
    %181 = vmatpush2.msra.mxu0 0.0
    %182 = vmatprep.subr.mxu0 0.0
    %183 = vmatpush2.msra.mxu0 0.0
    %184 = vmatprep.subr.mxu0 0.0
    %185 = vmatpush2.msra.mxu0 0.0
    %186 = vmatprep.subr.mxu0 0.0
    %187 = vmatpush2.msra.mxu0 0.0
    %188 = vmatprep.subr.mxu0 0.0
    %189 = vmatpush2.msra.mxu0 0.0
    %190 = vmatprep.subr.mxu0 0.0
    %191 = vmatpush2.msra.mxu0 0.0
    %192 = vmatprep.subr.mxu0 0.0
    %193 = vmatpush2.msra.mxu0 0.0
    %194 = vmatprep.subr.mxu0 0.0
    %195 = vmatpush2.msra.mxu0 0.0
    %196 = vmatprep.subr.mxu0 0.0
    %197 = vmatpush2.msra.mxu0 0.0
    %198 = vmatprep.subr.mxu0 0.0
    %199 = vmatpush2.msra.mxu0 0.0
    %200 = vmatprep.subr.mxu0 0.0
    %201 = vmatpush2.msra.mxu0 0.0
    %202 = vmatprep.subr.mxu0 0.0
    %203 = vmatpush2.msra.mxu0 0.0
    %204 = vmatprep.mubr.f32.mxu0 0.0
    %205 = vmatmul.mubr.f32.gmra.mxu0 %v116
    %v206 = vpop.f32.mrf.mxu0
    %v207 = vadd.f32 %v138, %v206
    %v208 = vpop.f32.mrf.mxu0
    %209 = vdwg.mxu0
    %v210 = vmax.f32 %v207, 0.0
    %v211 = vrot.slane %v210, 4
    %v212 = vadd.f32 %v210, %v211
    %v213 = vrot.slane %v212, 2
    %v214 = vadd.f32 %v212, %v213
    %v215 = vrot.slane %v214, 1
    %v216 = vadd.f32 %v214, %v215
    %v217 = vld [vmem:[#allocation5] sm:$0xff]
    %v218 = vld [vmem:[#allocation5 + $0x8] sm:$0xff]
    %v219 = vld [vmem:[#allocation5 + $0x10] sm:$0xff]
    %v220 = vld [vmem:[#allocation5 + $0x18] sm:$0xff]
    %v221 = vld [vmem:[#allocation5 + $0x20] sm:$0xff]
    %v222 = vld [vmem:[#allocation5 + $0x28] sm:$0xff]
    %v223 = vld [vmem:[#allocation5 + $0x30] sm:$0xff]
    %v224 = vld [vmem:[#allocation5 + $0x38] sm:$0xff]
    %v225 = vld [vmem:[#allocation5 + $0x40] sm:$0xff]
    %v226 = vld [vmem:[#allocation5 + $0x48] sm:$0xff]
    %v227 = vld [vmem:[#allocation5 + $0x50] sm:$0xff]
    %v228 = vld [vmem:[#allocation5 + $0x58] sm:$0xff]
    %v229 = vld [vmem:[#allocation5 + $0x60] sm:$0xff]
    %v230 = vld [vmem:[#allocation5 + $0x68] sm:$0xff]
    %v231 = vld [vmem:[#allocation5 + $0x70] sm:$0xff]
    %v232 = vld [vmem:[#allocation5 + $0x78] sm:$0xff]
    %v233 = vld [vmem:[%s6] sm:$0x1]
    %234 = vmatprep.subr.mxu0 0.0
    %235 = vmatpush1.msra.mxu0 %v232
    %236 = vmatprep.subr.mxu0 0.0
    %237 = vmatpush1.msra.mxu0 %v231
    %238 = vmatprep.subr.mxu0 0.0
    %239 = vmatpush1.msra.mxu0 %v230
    %240 = vmatprep.subr.mxu0 0.0
    %241 = vmatpush1.msra.mxu0 %v229
    %242 = vmatprep.subr.mxu0 0.0
    %243 = vmatpush1.msra.mxu0 %v228
    %244 = vmatprep.subr.mxu0 0.0
    %245 = vmatpush1.msra.mxu0 %v227
    %246 = vmatprep.subr.mxu0 0.0
    %247 = vmatpush1.msra.mxu0 %v226
    %248 = vmatprep.subr.mxu0 0.0
    %249 = vmatpush1.msra.mxu0 %v225
    %250 = vmatprep.subr.mxu0 0.0
    %251 = vmatpush1.msra.mxu0 %v224
    %252 = vmatprep.subr.mxu0 0.0
    %253 = vmatpush1.msra.mxu0 %v223
    %254 = vmatprep.subr.mxu0 0.0
    %255 = vmatpush1.msra.mxu0 %v222
    %256 = vmatprep.subr.mxu0 0.0
    %257 = vmatpush1.msra.mxu0 %v221
    %258 = vmatprep.subr.mxu0 0.0
    %259 = vmatpush1.msra.mxu0 %v220
    %260 = vmatprep.subr.mxu0 0.0
    %261 = vmatpush1.msra.mxu0 %v219
    %262 = vmatprep.subr.mxu0 0.0
    %263 = vmatpush1.msra.mxu0 %v218
    %264 = vmatprep.subr.mxu0 0.0
    %265 = vmatpush1.msra.mxu0 %v217
    %266 = vmatprep.subr.mxu0 0.0
    %267 = vmatpush2.msra.mxu0 0.0
    %268 = vmatprep.subr.mxu0 0.0
    %269 = vmatpush2.msra.mxu0 0.0
    %270 = vmatprep.subr.mxu0 0.0
    %271 = vmatpush2.msra.mxu0 0.0
    %272 = vmatprep.subr.mxu0 0.0
    %273 = vmatpush2.msra.mxu0 0.0
    %274 = vmatprep.subr.mxu0 0.0
    %275 = vmatpush2.msra.mxu0 0.0
    %276 = vmatprep.subr.mxu0 0.0
    %277 = vmatpush2.msra.mxu0 0.0
    %278 = vmatprep.subr.mxu0 0.0
    %279 = vmatpush2.msra.mxu0 0.0
    %280 = vmatprep.subr.mxu0 0.0
    %281 = vmatpush2.msra.mxu0 0.0
    %282 = vmatprep.subr.mxu0 0.0
    %283 = vmatpush2.msra.mxu0 0.0
    %284 = vmatprep.subr.mxu0 0.0
    %285 = vmatpush2.msra.mxu0 0.0
    %286 = vmatprep.subr.mxu0 0.0
    %287 = vmatpush2.msra.mxu0 0.0
    %288 = vmatprep.subr.mxu0 0.0
    %289 = vmatpush2.msra.mxu0 0.0
    %290 = vmatprep.subr.mxu0 0.0
    %291 = vmatpush2.msra.mxu0 0.0
    %292 = vmatprep.subr.mxu0 0.0
    %293 = vmatpush2.msra.mxu0 0.0
    %294 = vmatprep.subr.mxu0 0.0
    %295 = vmatpush2.msra.mxu0 0.0
    %296 = vmatprep.subr.mxu0 0.0
    %297 = vmatpush2.msra.mxu0 0.0
    %298 = vmatprep.mubr.f32.mxu0 0.0
    %299 = vmatmul.mubr.f32.gmra.mxu0 %v216
    %v300 = vpop.f32.mrf.mxu0
    %v301 = vadd.f32 %v233, %v300
    %v302 = vpop.f32.mrf.mxu0
    %303 = vdwg.mxu0
    %v304 = vmax.f32 %v301, 0.0
    %v305 = vld [vmem:[#allocation7] sm:$0xff]
    %v306 = vld [vmem:[#allocation7 + $0x8] sm:$0xff]
    %v307 = vld [vmem:[#allocation7 + $0x10] sm:$0xff]
    %v308 = vld [vmem:[#allocation7 + $0x18] sm:$0xff]
    %v309 = vld [vmem:[#allocation7 + $0x20] sm:$0xff]
    %v310 = vld [vmem:[#allocation7 + $0x28] sm:$0xff]
    %v311 = vld [vmem:[#allocation7 + $0x30] sm:$0xff]
    %v312 = vld [vmem:[#allocation7 + $0x38] sm:$0xff]
    %v313 = vld [vmem:[#allocation7 + $0x40] sm:$0xff]
    %v314 = vld [vmem:[#allocation7 + $0x48] sm:$0xff]
    %v315 = vld [vmem:[#allocation7 + $0x50] sm:$0xff]
    %v316 = vld [vmem:[#allocation7 + $0x58] sm:$0xff]
    %v317 = vld [vmem:[#allocation7 + $0x60] sm:$0xff]
    %v318 = vld [vmem:[#allocation7 + $0x68] sm:$0xff]
    %v319 = vld [vmem:[#allocation7 + $0x70] sm:$0xff]
    %v320 = vld [vmem:[#allocation7 + $0x78] sm:$0xff]
    %v321 = vld [vmem:[%s8] sm:$0x1]
    %322 = vmatprep.subr.mxu0 0.0
    %323 = vmatpush1.msra.mxu0 %v320
    %324 = vmatprep.subr.mxu0 0.0
    %325 = vmatpush1.msra.mxu0 %v319
    %326 = vmatprep.subr.mxu0 0.0
    %327 = vmatpush1.msra.mxu0 %v318
    %328 = vmatprep.subr.mxu0 0.0
    %329 = vmatpush1.msra.mxu0 %v317
    %330 = vmatprep.subr.mxu0 0.0
    %331 = vmatpush1.msra.mxu0 %v316
    %332 = vmatprep.subr.mxu0 0.0
    %333 = vmatpush1.msra.mxu0 %v315
    %334 = vmatprep.subr.mxu0 0.0
    %335 = vmatpush1.msra.mxu0 %v314
    %336 = vmatprep.subr.mxu0 0.0
    %337 = vmatpush1.msra.mxu0 %v313
    %338 = vmatprep.subr.mxu0 0.0
    %339 = vmatpush1.msra.mxu0 %v312
    %340 = vmatprep.subr.mxu0 0.0
    %341 = vmatpush1.msra.mxu0 %v311
    %342 = vmatprep.subr.mxu0 0.0
    %343 = vmatpush1.msra.mxu0 %v310
    %344 = vmatprep.subr.mxu0 0.0
    %345 = vmatpush1.msra.mxu0 %v309
    %346 = vmatprep.subr.mxu0 0.0
    %347 = vmatpush1.msra.mxu0 %v308
    %348 = vmatprep.subr.mxu0 0.0
    %349 = vmatpush1.msra.mxu0 %v307
    %350 = vmatprep.subr.mxu0 0.0
    %351 = vmatpush1.msra.mxu0 %v306
    %352 = vmatprep.subr.mxu0 0.0
    %353 = vmatpush1.msra.mxu0 %v305
    %354 = vmatprep.subr.mxu0 0.0
    %355 = vmatpush2.msra.mxu0 0.0
    %356 = vmatprep.subr.mxu0 0.0
    %357 = vmatpush2.msra.mxu0 0.0
    %358 = vmatprep.subr.mxu0 0.0
    %359 = vmatpush2.msra.mxu0 0.0
    %360 = vmatprep.subr.mxu0 0.0
    %361 = vmatpush2.msra.mxu0 0.0
    %362 = vmatprep.subr.mxu0 0.0
    %363 = vmatpush2.msra.mxu0 0.0
    %364 = vmatprep.subr.mxu0 0.0
    %365 = vmatpush2.msra.mxu0 0.0
    %366 = vmatprep.subr.mxu0 0.0
    %367 = vmatpush2.msra.mxu0 0.0
    %368 = vmatprep.subr.mxu0 0.0
    %369 = vmatpush2.msra.mxu0 0.0
    %370 = vmatprep.subr.mxu0 0.0
    %371 = vmatpush2.msra.mxu0 0.0
    %372 = vmatprep.subr.mxu0 0.0
    %373 = vmatpush2.msra.mxu0 0.0
    %374 = vmatprep.subr.mxu0 0.0
    %375 = vmatpush2.msra.mxu0 0.0
    %376 = vmatprep.subr.mxu0 0.0
    %377 = vmatpush2.msra.mxu0 0.0
    %378 = vmatprep.subr.mxu0 0.0
    %379 = vmatpush2.msra.mxu0 0.0
    %380 = vmatprep.subr.mxu0 0.0
    %381 = vmatpush2.msra.mxu0 0.0
    %382 = vmatprep.subr.mxu0 0.0
    %383 = vmatpush2.msra.mxu0 0.0
    %384 = vmatprep.subr.mxu0 0.0
    %385 = vmatpush2.msra.mxu0 0.0
    %386 = vmatprep.mubr.f32.mxu0 0.0
    %387 = vmatmul.mubr.f32.gmra.mxu0 %v304
    %v388 = vpop.f32.mrf.mxu0
    %v389 = vadd.f32 %v321, %v388
    %v390 = vpop.f32.mrf.mxu0
    %391 = vdwg.mxu0
    %v392 = vmax.f32 %v389, 0.0
    %v393 = vld [vmem:[#allocation8] sm:$0xff]
    %v394 = vld [vmem:[#allocation8 + $0x8] sm:$0xff]
    %v395 = vld [vmem:[#allocation8 + $0x10] sm:$0xff]
    %v396 = vld [vmem:[#allocation8 + $0x18] sm:$0xff]
    %v397 = vld [vmem:[#allocation8 + $0x20] sm:$0xff]
    %v398 = vld [vmem:[#allocation8 + $0x28] sm:$0xff]
    %v399 = vld [vmem:[#allocation8 + $0x30] sm:$0xff]
    %v400 = vld [vmem:[#allocation8 + $0x38] sm:$0xff]
    %v401 = vld [vmem:[#allocation8 + $0x40] sm:$0xff]
    %v402 = vld [vmem:[#allocation8 + $0x48] sm:$0xff]
    %v403 = vld [vmem:[#allocation8 + $0x50] sm:$0xff]
    %v404 = vld [vmem:[#allocation8 + $0x58] sm:$0xff]
    %v405 = vld [vmem:[#allocation8 + $0x60] sm:$0xff]
    %v406 = vld [vmem:[#allocation8 + $0x68] sm:$0xff]
    %v407 = vld [vmem:[#allocation8 + $0x70] sm:$0xff]
    %v408 = vld [vmem:[#allocation8 + $0x78] sm:$0xff]
    %v409 = vld [vmem:[%s10] sm:$0x1]
    %410 = vmatprep.subr.mxu0 0.0
    %411 = vmatpush1.msra.mxu0 %v408
    %412 = vmatprep.subr.mxu0 0.0
    %413 = vmatpush1.msra.mxu0 %v407
    %414 = vmatprep.subr.mxu0 0.0
    %415 = vmatpush1.msra.mxu0 %v406
    %416 = vmatprep.subr.mxu0 0.0
    %417 = vmatpush1.msra.mxu0 %v405
    %418 = vmatprep.subr.mxu0 0.0
    %419 = vmatpush1.msra.mxu0 %v404
    %420 = vmatprep.subr.mxu0 0.0
    %421 = vmatpush1.msra.mxu0 %v403
    %422 = vmatprep.subr.mxu0 0.0
    %423 = vmatpush1.msra.mxu0 %v402
    %424 = vmatprep.subr.mxu0 0.0
    %425 = vmatpush1.msra.mxu0 %v401
    %426 = vmatprep.subr.mxu0 0.0
    %427 = vmatpush1.msra.mxu0 %v400
    %428 = vmatprep.subr.mxu0 0.0
    %429 = vmatpush1.msra.mxu0 %v399
    %430 = vmatprep.subr.mxu0 0.0
    %431 = vmatpush1.msra.mxu0 %v398
    %432 = vmatprep.subr.mxu0 0.0
    %433 = vmatpush1.msra.mxu0 %v397
    %434 = vmatprep.subr.mxu0 0.0
    %435 = vmatpush1.msra.mxu0 %v396
    %436 = vmatprep.subr.mxu0 0.0
    %437 = vmatpush1.msra.mxu0 %v395
    %438 = vmatprep.subr.mxu0 0.0
    %439 = vmatpush1.msra.mxu0 %v394
    %440 = vmatprep.subr.mxu0 0.0
    %441 = vmatpush1.msra.mxu0 %v393
    %442 = vmatprep.subr.mxu0 0.0
    %443 = vmatpush2.msra.mxu0 0.0
    %444 = vmatprep.subr.mxu0 0.0
    %445 = vmatpush2.msra.mxu0 0.0
    %446 = vmatprep.subr.mxu0 0.0
    %447 = vmatpush2.msra.mxu0 0.0
    %448 = vmatprep.subr.mxu0 0.0
    %449 = vmatpush2.msra.mxu0 0.0
    %450 = vmatprep.subr.mxu0 0.0
    %451 = vmatpush2.msra.mxu0 0.0
    %452 = vmatprep.subr.mxu0 0.0
    %453 = vmatpush2.msra.mxu0 0.0
    %454 = vmatprep.subr.mxu0 0.0
    %455 = vmatpush2.msra.mxu0 0.0
    %456 = vmatprep.subr.mxu0 0.0
    %457 = vmatpush2.msra.mxu0 0.0
    %458 = vmatprep.subr.mxu0 0.0
    %459 = vmatpush2.msra.mxu0 0.0
    %460 = vmatprep.subr.mxu0 0.0
    %461 = vmatpush2.msra.mxu0 0.0
    %462 = vmatprep.subr.mxu0 0.0
    %463 = vmatpush2.msra.mxu0 0.0
    %464 = vmatprep.subr.mxu0 0.0
    %465 = vmatpush2.msra.mxu0 0.0
    %466 = vmatprep.subr.mxu0 0.0
    %467 = vmatpush2.msra.mxu0 0.0
    %468 = vmatprep.subr.mxu0 0.0
    %469 = vmatpush2.msra.mxu0 0.0
    %470 = vmatprep.subr.mxu0 0.0
    %471 = vmatpush2.msra.mxu0 0.0
    %472 = vmatprep.subr.mxu0 0.0
    %473 = vmatpush2.msra.mxu0 0.0
    %474 = vmatprep.mubr.f32.mxu0 0.0
    %475 = vmatmul.mubr.f32.gmra.mxu0 %v392
    %v476 = vpop.f32.mrf.mxu0
    %v477 = vadd.f32 %v409, %v476
    %v478 = vpop.f32.mrf.mxu0
    %479 = vdwg.mxu0
    %480 = vst [vmem:[#allocation10] sm:$0x1] %v477
    // Predicated region
    $region62: #{tpu_custom_call.1} parent=1 // pred_check
      _
    $region63: #{tpu_custom_call.1} parent=1 // pred_check_branch
      %482 = sbr.rel (0) target = $region65
    $region64: #{tpu_custom_call.1} parent=1 // pred_region
      %s484 = ssub.s32 16, 16
      %485 = vsyncadd [#allocation4], %s484
      %s487 = sshll.u32 [#allocation10], 4
      %s488 = int_to_ptr.vmem [resolvable:$true] %s487
      %490 = dma.vmem_to_hbm [thread:$0]  %s488, 16, %s11, [#allocation4]
    $region65: #{tpu_custom_call.1} parent=1 // pred_fallthru
      _
    // Predicated region
    $region66: #{tpu_custom_call.1} parent=1 // pred_check
      _
    $region67: #{tpu_custom_call.1} parent=1 // pred_check_branch
      %492 = sbr.rel (0) target = $region69
    $region68: #{tpu_custom_call.1} parent=1 // pred_region
      %493 = dma.done [#allocation4], 16
    $region69: #{tpu_custom_call.1} parent=1 // pred_fallthru
      _
    %494 = vsyncpa [#allocation3], 1
    %495 = vsyncpa [#allocation6], 1
    %496 = vsyncpa [#allocation9], 1
    %497 = vsyncpa [#allocation4], 1

</llo_original>
